<compile_context>
chip_gen: v7x
topology: tpu7x:2x2x1
jax: 0.10.0
libtpu: 0.0.40
codegen_flags: <defaults>
</compile_context>

<pallas_src>
import jax
import jax.numpy as jnp
from jax import lax
from jax.experimental import pallas as pl
from jax.experimental.pallas import tpu as pltpu


def _round_up(x, m):
    return (x + m - 1) // m * m


def _inverted_embed_kernel(x_ref, w_ref, b_ref, o_ref):
    # x_ref: (T, TV) time-major slab for one (batch, variate-tile)
    # w_ref: (T, D)  VMEM-resident weights ; b_ref: (1, D) resident bias
    # o_ref: (TV, D) lane-dense output tile
    acc = lax.dot_general(
        x_ref[...], w_ref[...],
        dimension_numbers=(((0,), (0,)), ((), ())),   # contract over time (dim 0 / 0)
        preferred_element_type=jnp.float32)
    o_ref[...] = (acc + b_ref[...].astype(jnp.float32)).astype(o_ref.dtype)


def _choose_v_tile(V, T, D, itemsize):
    """Pick the variate tile TV and padded variate extent Vp."""
    resident = (T * D + D) * itemsize               # weights + bias, live all steps

    def step_bytes(tv):                             # double-buffered x tile + out tile
        return 2 * (T * tv + tv * D) * itemsize

    # Conservative budget: comfortably under v5e's 16 MiB scoped-VMEM default and far
    # under v7x's 64 MiB physical VMEM, so no vmem_limit_bytes override is needed.
    budget = 12 * 1024 * 1024
    if resident + step_bytes(V) <= budget:
        return V, V                                 # single full-V block (legal for any V)
    for tv in (1024, 512, 256, 128):                # 128-multiples: (8,128)-friendly tiles
        if resident + step_bytes(tv) <= budget:
            return tv, _round_up(V, tv)
    return 128, _round_up(V, 128)


def _inverted_linear(xc, w, b):
    """xc: [B, T, V] (time-major), w: [T, D], b: [D] -> [B, V, D]."""
    B, T, V = xc.shape
    D = w.shape[1]
    itemsize = jnp.dtype(xc.dtype).itemsize
    TV, Vp = _choose_v_tile(V, T, D, itemsize)
    if Vp != V:
        # Pad the variate axis so every block is a full (8,128)-friendly tile; padded
        # rows produce bias-only outputs that are sliced off below.
        xc = jnp.concatenate([xc, jnp.zeros((B, T, Vp - V), dtype=xc.dtype)], axis=-1)
    b2d = b.reshape(1, D)
    nv = Vp // TV

    cost = pl.CostEstimate(
        flops=2 * B * Vp * T * D,
        transcendentals=0,
        bytes_accessed=itemsize * (B * T * Vp + T * D + D + B * Vp * D))

    out = pl.pallas_call(
        _inverted_embed_kernel,
        out_shape=jax.ShapeDtypeStruct((B, Vp, D), xc.dtype),
        grid_spec=pltpu.PrefetchScalarGridSpec(
            num_scalar_prefetch=0,
            grid=(B, nv),
            in_specs=[
                # x: one (T, TV) time-major slab per (batch, v-tile); batch dim squeezed.
                pl.BlockSpec((None, T, TV), lambda bi, vi: (bi, 0, vi)),
                # Weights / bias: constant index_map -> stay resident in VMEM.
                pl.BlockSpec((T, D), lambda bi, vi: (0, 0)),
                pl.BlockSpec((1, D), lambda bi, vi: (0, 0)),
            ],
            out_specs=pl.BlockSpec((None, TV, D), lambda bi, vi: (bi, vi, 0)),
        ),
        compiler_params=pltpu.CompilerParams(
            dimension_semantics=("parallel", "parallel")),
        cost_estimate=cost,
    )(xc, w, b2d)

    if Vp != V:
        out = out[:, :V, :]
    return out


def data_embedding_inverted(x, x_mark, w, b):
    """
    x:      [B, T, N]
    x_mark: [B, T, M] or None
    w:      [T, d_model]   (transposed nn.Linear weight)
    b:      [d_model]
    returns [B, N(+M), d_model]
    """
    if x_mark is not None:
        # Concat along the (contiguous) feature axis -- no HBM transpose anywhere.
        xc = jnp.concatenate([x, x_mark], axis=-1)   # [B, T, N+M]
    else:
        xc = x                                       # zero-copy path
    out = _inverted_linear(xc, w, b)
    # Dropout(p=0.1) in eval mode == identity.
    return out


if __name__ == "__main__":
    # Small demo shapes: batch=2, seq_len T=16 (the Linear's c_in), N=6 variates,
    # M=3 time-mark features, d_model=128 (small but lane-dense output).
    B, T, N, M, d_model = 2, 16, 6, 3, 128
    c_in = T

    key = jax.random.PRNGKey(0)
    kx, km, kw, kb = jax.random.split(key, 4)

    x = jax.random.normal(kx, (B, T, N), dtype=jnp.float32)
    x_mark = jax.random.normal(km, (B, T, M), dtype=jnp.float32)

    # Deterministic nn.Linear-style init: U(-1/sqrt(c_in), 1/sqrt(c_in)).
    bound = 1.0 / float(jnp.sqrt(jnp.float32(c_in)))
    w = jax.random.uniform(kw, (c_in, d_model), jnp.float32, -bound, bound)
    b = jax.random.uniform(kb, (d_model,), jnp.float32, -bound, bound)

    fwd = jax.jit(data_embedding_inverted)
    out = jax.block_until_ready(fwd(x, x_mark, w, b))

    # Pure-JAX reference (same math as the PyTorch forward, eval-mode dropout).
    xt = jnp.concatenate(
        [jnp.transpose(x, (0, 2, 1)), jnp.transpose(x_mark, (0, 2, 1))], axis=1)
    ref = jnp.einsum("bvt,td->bvd", xt, w) + b
    assert out.shape == (B, N + M, d_model), out.shape
    assert jnp.allclose(out, ref, atol=2e-5, rtol=2e-5), float(
        jnp.max(jnp.abs(out - ref)))

    # Also exercise the x_mark=None path.
    out2 = jax.block_until_ready(fwd(x, None, w, b))
    ref2 = jnp.einsum("btn,td->bnd", x, w) + b
    assert out2.shape == (B, N, d_model), out2.shape
    assert jnp.allclose(out2, ref2, atol=2e-5, rtol=2e-5)

    print("KERNEL_OK")
</pallas_src>

<mosaic_0001>
module attributes {stable_mosaic.version = 11 : i64} {
  func.func @_inverted_embed_kernel(%arg0: i32, %arg1: i32, %arg2: memref<1x16x9xf32, #tpu.memory_space<vmem>>, %arg3: memref<16x128xf32, #tpu.memory_space<vmem>>, %arg4: memref<1x128xf32, #tpu.memory_space<vmem>>, %arg5: memref<1x9x128xf32, #tpu.memory_space<vmem>>) attributes {dimension_semantics = [#tpu.dimension_semantics<parallel>, #tpu.dimension_semantics<parallel>], iteration_bounds = array<i64: 2, 1>, scalar_prefetch = 0 : i64, scratch_operands = 0 : i64, tpu.core_type = #tpu.core_type<tc>, window_params = [{transform_indices = @transform_0, window_bounds = array<i64: 1, 16, 9>}, {pipeline_mode = #tpu.pipeline_mode<synchronous>, transform_indices = @transform_1, window_bounds = array<i64: 16, 128>}, {pipeline_mode = #tpu.pipeline_mode<synchronous>, transform_indices = @transform_2, window_bounds = array<i64: 1, 128>}, {transform_indices = @transform_3, window_bounds = array<i64: 1, 9, 128>}]} {
    %c0 = arith.constant 0 : index
    %c0_0 = arith.constant 0 : index
    %c0_1 = arith.constant 0 : index
    %0 = vector.load %arg2[%c0, %c0_0, %c0_1] : memref<1x16x9xf32, #tpu.memory_space<vmem>>, vector<1x16x9xf32>
    %1 = vector.shape_cast %0 : vector<1x16x9xf32> to vector<16x9xf32>
    %c0_2 = arith.constant 0 : index
    %c0_3 = arith.constant 0 : index
    %2 = vector.load %arg3[%c0_2, %c0_3] : memref<16x128xf32, #tpu.memory_space<vmem>>, vector<16x128xf32>
    %cst = arith.constant dense<0.000000e+00> : vector<9x128xf32>
    %3 = tpu.matmul %1, %2, %cst {dimension_numbers = #tpu.dot_dimension_numbers<[0], [0], [1], [1], [0, 1, 1, 1], [], []>} : vector<16x9xf32>, vector<16x128xf32>, vector<9x128xf32> -> vector<9x128xf32>
    %c0_4 = arith.constant 0 : index
    %c0_5 = arith.constant 0 : index
    %4 = vector.load %arg4[%c0_4, %c0_5] : memref<1x128xf32, #tpu.memory_space<vmem>>, vector<1x128xf32>
    %5 = vector.broadcast %4 : vector<1x128xf32> to vector<9x128xf32>
    %6 = arith.addf %3, %5 : vector<9x128xf32>
    %c0_6 = arith.constant 0 : index
    %c0_7 = arith.constant 0 : index
    %c0_8 = arith.constant 0 : index
    %7 = vector.load %arg5[%c0_6, %c0_7, %c0_8] : memref<1x9x128xf32, #tpu.memory_space<vmem>>, vector<1x9x128xf32>
    %8 = vector.shape_cast %7 : vector<1x9x128xf32> to vector<9x128xf32>
    %9 = vector.shape_cast %6 : vector<9x128xf32> to vector<1x9x128xf32>
    tpu.vector_store %arg5[%c0_6, %c0_7, %c0_8], %9 {strides = array<i32>} : memref<1x9x128xf32, #tpu.memory_space<vmem>>, vector<1x9x128xf32>,
    return
  }
  func.func @transform_0(%arg0: i32, %arg1: i32) -> (i32, i32, i32) {
    %c0_i32 = arith.constant 0 : i32
    %c0_i32_0 = arith.constant 0 : i32
    return %arg0, %c0_i32, %arg1 : i32, i32, i32
  }
  func.func @transform_1(%arg0: i32, %arg1: i32) -> (i32, i32) {
    %c0_i32 = arith.constant 0 : i32
    %c0_i32_0 = arith.constant 0 : i32
    %c0_i32_1 = arith.constant 0 : i32
    return %c0_i32, %c0_i32_0 : i32, i32
  }
  func.func @transform_2(%arg0: i32, %arg1: i32) -> (i32, i32) {
    %c0_i32 = arith.constant 0 : i32
    %c0_i32_0 = arith.constant 0 : i32
    %c0_i32_1 = arith.constant 0 : i32
    return %c0_i32, %c0_i32_0 : i32, i32
  }
  func.func @transform_3(%arg0: i32, %arg1: i32) -> (i32, i32, i32) {
    %c0_i32 = arith.constant 0 : i32
    %c0_i32_0 = arith.constant 0 : i32
    return %arg0, %arg1, %c0_i32 : i32, i32, i32
  }
}

</mosaic_0001>

<llo_original>
// kernel: data_embedding_inverted.1
$region0: #{data_embedding_inverted.1}
  #allocation0 [shape = 'u32[]', space=smem, size = 0x4, offset = 0x4, fixed_abs, tag = 'smem constant byte address 0x4 - core index']
  #allocation1 [shape = 'u32[144,128]{1,0:T(1,128)}', space=vmem, size = 0x12000, scoped, tag = 'internal scratch']
  %s0 = inlined_call_operand.vmem [shape: f32[2,16,9], index: 0, kind: input, shape index: {}]
  %s1 = inlined_call_operand.vmem [shape: f32[16,128], index: 1, kind: input, shape index: {}]
  %s2 = inlined_call_operand.vmem [shape: f32[1,128], index: 2, kind: input, shape index: {}]
  %s3 = inlined_call_operand.vmem [shape: f32[2,9,128], index: 3, kind: output, shape index: {}]
  %s4 = sld [smem:[#allocation0]]
  $region45: #{data_embedding_inverted.1} parent=0
    _
  %s6 = ssub.s32 1, %s4
  %s7 = scalar_select 0, %s6, %s4
  loop: start=0, step=1, limit=4
  $region2: #{data_embedding_inverted.1} parent=0 // loop_pre_header
    _
  $region3: #{data_embedding_inverted.1} parent=0 // loop_header
    %s9 = sphi 0, %s13
    %p10 = scmp.ge.s32.totalorder %s9, 4
    %s16 = sphi 0, %s28
    %s17 = sphi 0, %s24
    %s18 = sphi 0, %s16
    %s19 = sphi 0, %s17
    %s20 = sphi 0, %s18
    %s21 = sphi 0, %s19
    %s33 = sphi 0, %s35
    %s36 = sphi 0, %s33
    %s37 = sphi 0, %s36
    %s53 = sphi 0, %s37
    %s57 = sphi 0, %s57
    %s59 = sphi 0, %s57
    %s60 = sphi 0, %s59
    %s74 = sphi 0, %s60
    %s78 = sphi 0, %s78
    %s80 = sphi 0, %s78
    %s81 = sphi 0, %s80
    %s95 = sphi 0, %s81
    %s103 = sphi 0, %s105
    %s106 = sphi 0, %s103
    %s107 = sphi 0, %s106
    %s123 = sphi 0, %s107
  $region4: #{data_embedding_inverted.1} parent=0 // loop_header_branch
    %12 = sbr.rel (%p10) target = $region8
  $region5: #{data_embedding_inverted.1} parent=0 // loop_body
    %s14 = ssub.s32 %s9, 1
    %s15 = ssub.s32 %s9, 2
    %s22 = sadd.s32 1, %s17
    %p23 = scmp.ge.s32.totalorder %s22, 1
    %s24 = scalar_select %p23, 0, %s22
    %s25 = sadd.s32 1, %s16
    %s26 = scalar_select %p23, %s25, %s16
    %p27 = scmp.ge.s32.totalorder %s26, 2
    %s28 = scalar_select %p27, 0, %s26
    %s29 = ssub.s32 %s16, %s28
    %s30 = ssub.s32 %s17, %s24
    %s31 = sor.u32 %s29, %s30
    %p32 = scmp.eq.s32.totalorder %s31, 0
    %s34 = sadd.s32 %s33, 1
    %s35 = scalar_select %p32, %s33, %s34
    %p38 = pneg %p32
    %p39 = scmp.eq.s32.totalorder %s9, 1
    %p40 = por %p38, %p39
    %p41 = scmp.ne.s32.totalorder %s33, %s36
    %p42 = scmp.eq.s32.totalorder %s9, 0
    %p43 = por %p41, %p42
    %p44 = scmp.ne.s32.totalorder %s33, %s36
    %p45 = scmp.eq.s32.totalorder %s14, 1
    %p46 = por %p44, %p45
    %p47 = scmp.ne.s32.totalorder %s36, %s37
    %p48 = scmp.eq.s32.totalorder %s14, 0
    %p49 = por %p47, %p48
    %p50 = scmp.ne.s32.totalorder %s36, %s37
    %p51 = scmp.eq.s32.totalorder %s15, 1
    %p52 = por %p50, %p51
    %p54 = scmp.ne.s32.totalorder %s37, %s53
    %p55 = scmp.eq.s32.totalorder %s15, 0
    %p56 = por %p54, %p55
    %s58 = sadd.s32 %s57, 1
    %p61 = scmp.eq.s32.totalorder %s9, 1
    %p62 = scmp.ne.s32.totalorder %s57, %s59
    %p63 = scmp.eq.s32.totalorder %s9, 0
    %p64 = por %p62, %p63
    %p65 = scmp.ne.s32.totalorder %s57, %s59
    %p66 = scmp.eq.s32.totalorder %s14, 1
    %p67 = por %p65, %p66
    %p68 = scmp.ne.s32.totalorder %s59, %s60
    %p69 = scmp.eq.s32.totalorder %s14, 0
    %p70 = por %p68, %p69
    %p71 = scmp.ne.s32.totalorder %s59, %s60
    %p72 = scmp.eq.s32.totalorder %s15, 1
    %p73 = por %p71, %p72
    %p75 = scmp.ne.s32.totalorder %s60, %s74
    %p76 = scmp.eq.s32.totalorder %s15, 0
    %p77 = por %p75, %p76
    %s79 = sadd.s32 %s78, 1
    %p82 = scmp.eq.s32.totalorder %s9, 1
    %p83 = scmp.ne.s32.totalorder %s78, %s80
    %p84 = scmp.eq.s32.totalorder %s9, 0
    %p85 = por %p83, %p84
    %p86 = scmp.ne.s32.totalorder %s78, %s80
    %p87 = scmp.eq.s32.totalorder %s14, 1
    %p88 = por %p86, %p87
    %p89 = scmp.ne.s32.totalorder %s80, %s81
    %p90 = scmp.eq.s32.totalorder %s14, 0
    %p91 = por %p89, %p90
    %p92 = scmp.ne.s32.totalorder %s80, %s81
    %p93 = scmp.eq.s32.totalorder %s15, 1
    %p94 = por %p92, %p93
    %p96 = scmp.ne.s32.totalorder %s81, %s95
    %p97 = scmp.eq.s32.totalorder %s15, 0
    %p98 = por %p96, %p97
    %s99 = ssub.s32 %s16, %s28
    %s100 = ssub.s32 %s17, %s24
    %s101 = sor.u32 %s99, %s100
    %p102 = scmp.eq.s32.totalorder %s101, 0
    %s104 = sadd.s32 %s103, 1
    %s105 = scalar_select %p102, %s103, %s104
    %p108 = pneg %p102
    %p109 = scmp.eq.s32.totalorder %s9, 1
    %p110 = por %p108, %p109
    %p111 = scmp.ne.s32.totalorder %s103, %s106
    %p112 = scmp.eq.s32.totalorder %s9, 0
    %p113 = por %p111, %p112
    %p114 = scmp.ne.s32.totalorder %s103, %s106
    %p115 = scmp.eq.s32.totalorder %s14, 1
    %p116 = por %p114, %p115
    %p117 = scmp.ne.s32.totalorder %s106, %s107
    %p118 = scmp.eq.s32.totalorder %s14, 0
    %p119 = por %p117, %p118
    %p120 = scmp.ne.s32.totalorder %s106, %s107
    %p121 = scmp.eq.s32.totalorder %s15, 1
    %p122 = por %p120, %p121
    %p124 = scmp.ne.s32.totalorder %s107, %s123
    %p125 = scmp.eq.s32.totalorder %s15, 0
    %p126 = por %p124, %p125
    %p127 = scmp.le.s32.totalorder 1, %s9
    %p128 = scmp.lt.s32.totalorder %s9, 3
    %p129 = pnand %p127, %p128
    %p130 = pneg %p129
    // Predicated region
    $region9: #{data_embedding_inverted.1} parent=5 // pred_check
      _
    $region10: #{data_embedding_inverted.1} parent=5 // pred_check_branch
      %132 = sbr.rel (%p129) target = $region12
    $region11: #{data_embedding_inverted.1} parent=5 // pred_region
      %s133 = ssub.s32 %s9, 1
      // Predicated region
      $region13: #{data_embedding_inverted.1} parent=11 // pred_check
        %p134 = pneg %p70
      $region14: #{data_embedding_inverted.1} parent=11 // pred_check_branch
        %136 = sbr.rel (%p134) target = $region16
      $region15: #{data_embedding_inverted.1} parent=11 // pred_region
        _
      $region16: #{data_embedding_inverted.1} parent=11 // pred_fallthru
        _
      // Predicated region
      $region17: #{data_embedding_inverted.1} parent=11 // pred_check
        %p137 = pneg %p91
      $region18: #{data_embedding_inverted.1} parent=11 // pred_check_branch
        %139 = sbr.rel (%p137) target = $region20
      $region19: #{data_embedding_inverted.1} parent=11 // pred_region
        _
      $region20: #{data_embedding_inverted.1} parent=11 // pred_fallthru
        _
    $region12: #{data_embedding_inverted.1} parent=5 // pred_fallthru
      _
    %p140 = scmp.lt.s32.totalorder %s9, 2
    // Predicated region
    $region21: #{data_embedding_inverted.1} parent=5 // pred_check
      %p141 = pneg %p140
    $region22: #{data_embedding_inverted.1} parent=5 // pred_check_branch
      %143 = sbr.rel (%p141) target = $region24
    $region23: #{data_embedding_inverted.1} parent=5 // pred_region
      // Predicated region
      $region25: #{data_embedding_inverted.1} parent=23 // pred_check
        %p144 = pneg %p43
      $region26: #{data_embedding_inverted.1} parent=23 // pred_check_branch
        %146 = sbr.rel (%p144) target = $region28
      $region27: #{data_embedding_inverted.1} parent=23 // pred_region
        %p147 = scmp.lt.s32.totalorder %s16, 1
        %s148 = scalar_select %p147, %s16, 1
        %p149 = scmp.lt.s32.totalorder %s17, 0
        %s150 = scalar_select %p149, %s17, 0
        %s151 = smul.addr %s148, 2
        %s152 = sadd.s32 %s150, %s151
        %s153 = smul.addr %s152, 8
        %s154 = scalar_lea.vmem %s0, %s153
      $region28: #{data_embedding_inverted.1} parent=23 // pred_fallthru
        _
    $region24: #{data_embedding_inverted.1} parent=5 // pred_fallthru
      _
    %p155 = scmp.le.s32.totalorder 1, %s9
    %p156 = scmp.lt.s32.totalorder %s9, 3
    %p157 = pnand %p155, %p156
    %p158 = pneg %p157
    // Predicated region
    $region29: #{data_embedding_inverted.1} parent=5 // pred_check
      _
    $region30: #{data_embedding_inverted.1} parent=5 // pred_check_branch
      %160 = sbr.rel (%p157) target = $region32
    $region31: #{data_embedding_inverted.1} parent=5 // pred_region
      %s161 = ssub.s32 %s9, 1
      %p162 = scmp.lt.s32.totalorder %s18, 1
      %s163 = scalar_select %p162, %s18, 1
      %p164 = scmp.lt.s32.totalorder %s19, 0
      %s165 = scalar_select %p164, %s19, 0
      %s166 = smul.addr %s163, 2
      %s167 = sadd.s32 %s165, %s166
      %s168 = smul.addr %s167, 8
      %s169 = scalar_lea.vmem %s0, %s168
      %p170 = pneg %p49
      %p171 = pneg %p46
      %p172 = pneg %p70
      %p173 = pneg %p67
      %p174 = pneg %p91
      %p175 = pneg %p88
      %p176 = pneg %p119
      %p177 = pneg %p116
      %s178 = smul.u32 2, %s19
      %p179 = scmp.lt.s32.totalorder %s18, 1
      %s180 = scalar_select %p179, %s18, 1
      %p181 = scmp.lt.s32.totalorder %s178, 1
      %s182 = scalar_select %p181, %s178, 1
      %s183 = smul.addr %s180, 2
      %s184 = sadd.s32 %s182, %s183
      %s185 = smul.addr %s184, 8
      %s186 = scalar_lea.vmem %s3, %s185
      %p187 = scmp.lt.s32.totalorder %s18, 1
      %s188 = scalar_select %p187, %s18, 1
      %p189 = scmp.lt.s32.totalorder %s19, 0
      %s190 = scalar_select %p189, %s19, 0
      %s191 = smul.addr %s188, 2
      %s192 = sadd.s32 %s190, %s191
      %s193 = smul.addr %s192, 8
      %s194 = scalar_lea.vmem %s0, %s193
      %s195 = smul.u32 2, %s19
      %p196 = scmp.lt.s32.totalorder %s18, 1
      %s197 = scalar_select %p196, %s18, 1
      %p198 = scmp.lt.s32.totalorder %s195, 1
      %s199 = scalar_select %p198, %s195, 1
      %s200 = smul.addr %s197, 2
      %s201 = sadd.s32 %s199, %s200
      %s202 = smul.addr %s201, 8
      %s203 = scalar_lea.vmem %s3, %s202
      %s204 = smul.u32 2, %s19
      %v205 = vld [vmem:[%s194] sm:$0xff]
      %v206 = vld [vmem:[%s194 + $0x8] sm:$0xff]
      %v207 = vld [vmem:[%s1] sm:$0xff]
      %v208 = vld [vmem:[%s1 + $0x8] sm:$0xff]
      %v209 = vld [vmem:[%s2] sm:$0x1]
      %v211 = vlaneseq
      %v212 = vshrl.u32 %v211, 7
      %v213 = vsub.s32 0, %v212
      %v214 = vrot.slane %v209, %v213
      %216 = vxpose.xlu0.b32.start [1/16] %v205, 128
      %217 = vxpose.xlu0.b32.cont [2/16] %v206, 128
      %218 = vxpose.xlu0.b32.cont [3/16] 0.0, 128
      %219 = vxpose.xlu0.b32.cont [4/16] 0.0, 128
      %220 = vxpose.xlu0.b32.cont [5/16] 0.0, 128
      %221 = vxpose.xlu0.b32.cont [6/16] 0.0, 128
      %222 = vxpose.xlu0.b32.cont [7/16] 0.0, 128
      %223 = vxpose.xlu0.b32.cont [8/16] 0.0, 128
      %224 = vxpose.xlu0.b32.cont [9/16] 0.0, 128
      %225 = vxpose.xlu0.b32.cont [10/16] 0.0, 128
      %226 = vxpose.xlu0.b32.cont [11/16] 0.0, 128
      %227 = vxpose.xlu0.b32.cont [12/16] 0.0, 128
      %228 = vxpose.xlu0.b32.cont [13/16] 0.0, 128
      %229 = vxpose.xlu0.b32.cont [14/16] 0.0, 128
      %230 = vxpose.xlu0.b32.cont [15/16] 0.0, 128
      %231 = vxpose.xlu0.b32.end [16/16] 0.0, 128
      %v232 = vpop.trf.xlu0
      %v233 = vpop.trf.xlu0
      %v234 = vpop.trf.xlu0
      %v235 = vpop.trf.xlu0
      %v236 = vpop.trf.xlu0
      %v237 = vpop.trf.xlu0
      %v238 = vpop.trf.xlu0
      %v239 = vpop.trf.xlu0
      %v240 = vpop.trf.xlu0
      %v241 = vpop.trf.xlu0
      %v242 = vpop.trf.xlu0
      %v243 = vpop.trf.xlu0
      %v244 = vpop.trf.xlu0
      %v245 = vpop.trf.xlu0
      %v246 = vpop.trf.xlu0
      %v247 = vpop.trf.xlu0
      %vm248 = vcmask 130048
      %v250 = vsel %vm248, %v232, 0
      %v253 = vsel %vm248, %v233, 0
      %255 = vmatprep.subr.mxu0 0.0
      %256 = vmatpush1.msra.mxu0 %v207
      %257 = vmatprep.subr.mxu0 0.0
      %258 = vmatpush1.msra.mxu0 %v208
      %259 = vmatprep.subr.mxu0 0.0
      %260 = vmatpush1.msra.mxu0 0.0
      %261 = vmatprep.subr.mxu0 0.0
      %262 = vmatpush1.msra.mxu0 0.0
      %263 = vmatprep.subr.mxu0 0.0
      %264 = vmatpush1.msra.mxu0 0.0
      %265 = vmatprep.subr.mxu0 0.0
      %266 = vmatpush1.msra.mxu0 0.0
      %267 = vmatprep.subr.mxu0 0.0
      %268 = vmatpush1.msra.mxu0 0.0
      %269 = vmatprep.subr.mxu0 0.0
      %270 = vmatpush1.msra.mxu0 0.0
      %271 = vmatprep.subr.mxu0 0.0
      %272 = vmatpush1.msra.mxu0 0.0
      %273 = vmatprep.subr.mxu0 0.0
      %274 = vmatpush1.msra.mxu0 0.0
      %275 = vmatprep.subr.mxu0 0.0
      %276 = vmatpush1.msra.mxu0 0.0
      %277 = vmatprep.subr.mxu0 0.0
      %278 = vmatpush1.msra.mxu0 0.0
      %279 = vmatprep.subr.mxu0 0.0
      %280 = vmatpush1.msra.mxu0 0.0
      %281 = vmatprep.subr.mxu0 0.0
      %282 = vmatpush1.msra.mxu0 0.0
      %283 = vmatprep.subr.mxu0 0.0
      %284 = vmatpush1.msra.mxu0 0.0
      %285 = vmatprep.subr.mxu0 0.0
      %286 = vmatpush1.msra.mxu0 0.0
      %287 = vmatprep.subr.mxu0 0.0
      %288 = vmatpush1.msra.mxu0 0.0
      %289 = vmatprep.subr.mxu0 0.0
      %290 = vmatpush1.msra.mxu0 0.0
      %291 = vmatprep.subr.mxu0 0.0
      %292 = vmatpush1.msra.mxu0 0.0
      %293 = vmatprep.subr.mxu0 0.0
      %294 = vmatpush1.msra.mxu0 0.0
      %295 = vmatprep.subr.mxu0 0.0
      %296 = vmatpush1.msra.mxu0 0.0
      %297 = vmatprep.subr.mxu0 0.0
      %298 = vmatpush1.msra.mxu0 0.0
      %299 = vmatprep.subr.mxu0 0.0
      %300 = vmatpush1.msra.mxu0 0.0
      %301 = vmatprep.subr.mxu0 0.0
      %302 = vmatpush1.msra.mxu0 0.0
      %303 = vmatprep.subr.mxu0 0.0
      %304 = vmatpush1.msra.mxu0 0.0
      %305 = vmatprep.subr.mxu0 0.0
      %306 = vmatpush1.msra.mxu0 0.0
      %307 = vmatprep.subr.mxu0 0.0
      %308 = vmatpush1.msra.mxu0 0.0
      %309 = vmatprep.subr.mxu0 0.0
      %310 = vmatpush1.msra.mxu0 0.0
      %311 = vmatprep.subr.mxu0 0.0
      %312 = vmatpush1.msra.mxu0 0.0
      %313 = vmatprep.subr.mxu0 0.0
      %314 = vmatpush1.msra.mxu0 0.0
      %315 = vmatprep.subr.mxu0 0.0
      %316 = vmatpush1.msra.mxu0 0.0
      %317 = vmatprep.subr.mxu0 0.0
      %318 = vmatpush1.msra.mxu0 0.0
      %319 = vmatprep.mubr.f32.mxu0 0.0
      %320 = vmatmul.mubr.f32.gmra.mrb[0].mxu0 %v250
      %v321 = vpop.f32.mrb[0].mxu0
      %v322 = vadd.f32 %v214, %v321
      %v323 = vpop.f32.mrb[0].mxu0
      %324 = vmatprep.mubr.f32.mxu0 0.0
      %325 = vmatmul.mubr.f32.gmra.mrb[0].mxu0 %v253
      %v326 = vpop.f32.mrb[0].mxu0
      %v327 = vadd.f32 %v214, %v326
      %v328 = vpop.f32.mrb[0].mxu0
      %329 = vdwg.mxu0
      %330 = vst [vmem:[%s203] sm:$0xff] %v322
      %331 = vst [vmem:[%s203 + $0x8] sm:$0x1] %v327
      %s332 = smul.u32 2, %s19
      %p333 = scmp.lt.s32.totalorder %s18, 1
      %s334 = scalar_select %p333, %s18, 1
      %p335 = scmp.lt.s32.totalorder %s332, 1
      %s336 = scalar_select %p335, %s332, 1
      %s337 = smul.addr %s334, 2
      %s338 = sadd.s32 %s336, %s337
      %s339 = smul.addr %s338, 8
      %s340 = scalar_lea.vmem %s3, %s339
      // Predicated region
      $region33: #{data_embedding_inverted.1} parent=31 // pred_check
        %p341 = pneg %p116
      $region34: #{data_embedding_inverted.1} parent=31 // pred_check_branch
        %343 = sbr.rel (%p341) target = $region36
      $region35: #{data_embedding_inverted.1} parent=31 // pred_region
        %s344 = smul.u32 2, %s19
      $region36: #{data_embedding_inverted.1} parent=31 // pred_fallthru
        _
    $region32: #{data_embedding_inverted.1} parent=5 // pred_fallthru
      _
    %p345 = scmp.le.s32.totalorder 2, %s9
    // Predicated region
    $region37: #{data_embedding_inverted.1} parent=5 // pred_check
      %p346 = pneg %p345
    $region38: #{data_embedding_inverted.1} parent=5 // pred_check_branch
      %348 = sbr.rel (%p346) target = $region40
    $region39: #{data_embedding_inverted.1} parent=5 // pred_region
      %s349 = ssub.s32 %s9, 2
      // Predicated region
      $region41: #{data_embedding_inverted.1} parent=39 // pred_check
        %p350 = pneg %p122
      $region42: #{data_embedding_inverted.1} parent=39 // pred_check_branch
        %352 = sbr.rel (%p350) target = $region44
      $region43: #{data_embedding_inverted.1} parent=39 // pred_region
        %s353 = smul.u32 2, %s21
        %p354 = scmp.lt.s32.totalorder %s20, 1
        %s355 = scalar_select %p354, %s20, 1
        %p356 = scmp.lt.s32.totalorder %s353, 1
        %s357 = scalar_select %p356, %s353, 1
        %s358 = smul.addr %s355, 2
        %s359 = sadd.s32 %s357, %s358
        %s360 = smul.addr %s359, 8
        %s361 = scalar_lea.vmem %s3, %s360
      $region44: #{data_embedding_inverted.1} parent=39 // pred_fallthru
        _
    $region40: #{data_embedding_inverted.1} parent=5 // pred_fallthru
      _
  $region6: #{data_embedding_inverted.1} parent=0 // loop_footer
    %s13 = sadd.s32 1, %s9
  $region7: #{data_embedding_inverted.1} parent=0 // loop_footer_branch
    %8 = sbr.rel target = $region3
  $region8: #{data_embedding_inverted.1} parent=0 // loop_exit
    _

</llo_original>
